<compile_context>
chip_gen: v6e
topology: v6e:2x2x1
jax: 0.10.0
libtpu: 0.0.40
codegen_flags: <defaults>
</compile_context>

<pallas_src>
import jax
import jax.numpy as jnp
from jax.experimental import pallas as pl
from jax.experimental.pallas import tpu as pltpu

EPS = 1e-5  # RevIN eps


def _rlinear_kernel(x_ref, w_ref, b_ref, sw_ref, aw_ref, ab_ref, o_ref):
    # x_ref : (L, Nt)   columns are (batch, channel) pairs
    # w_ref : (P, L)    Linear weight
    # b_ref : (P, 1)    Linear bias
    # sw_ref: (P, 1)    rowsum(W) precomputed in the wrapper
    # aw_ref: (1, Nt)   RevIN affine weight per column
    # ab_ref: (1, Nt)   RevIN affine bias per column
    # o_ref : (P, Nt)
    x = x_ref[...]                                          # [L, Nt] f32
    aw = aw_ref[...]                                        # [1, Nt]
    ab = ab_ref[...]                                        # [1, Nt]

    # --- RevIN stats over the seq dim, single pass ---
    m1 = jnp.mean(x, axis=0, keepdims=True)                 # [1, Nt] mean
    m2 = jnp.mean(x * x, axis=0, keepdims=True)             # [1, Nt] E[x^2]
    var = jnp.maximum(m2 - m1 * m1, 0.0)                    # biased variance
    std = jnp.sqrt(var + EPS)                               # [1, Nt]
    inv_std = jax.lax.rsqrt(var + EPS)                      # EUP rsqrt

    # Fold RevIN norm into a per-column scale/offset: xn = x*s + o
    s = aw * inv_std                                        # [1, Nt]
    o = ab - m1 * s                                         # [1, Nt]
    # Denorm factors
    inv_aw = pl.reciprocal(aw + EPS * EPS)                  # exact 1/(aw+eps^2)
    alpha = std * inv_aw                                    # [1, Nt]

    # --- Linear along seq dim on the raw data (MXU) ---
    y = jnp.dot(w_ref[...], x, preferred_element_type=jnp.float32)  # [P, Nt]

    # --- Epilogue: norm scale/offset via linearity, bias, then denorm ---
    # pred_lin = y*s + Sw*o + b ; pred = (pred_lin - ab)*alpha + mean
    t = y * s + sw_ref[...] * o + b_ref[...] - ab           # [P, Nt]
    o_ref[...] = (t * alpha + m1).astype(o_ref.dtype)


def _pick_col_tile(n, l, p):
    """Largest lane-dense (multiple-of-128) column tile that divides n and
    fits comfortably in scoped VMEM (double-buffered x + out tiles)."""
    budget = 16 * 1024 * 1024
    for t in (1024, 512, 256, 128):
        if n % t == 0 and (l + p) * t * 4 * 2 <= budget:
            return t
    return n  # full extent (allowed by the (8,128) rule when equal to the dim)


def rlinear_forward(x, lin_w, lin_b, aff_w, aff_b):
    """x: [B, L, C] f32; lin_w: [P, L]; lin_b: [P]; aff_w, aff_b: [C]."""
    B, L, C = x.shape
    P = lin_w.shape[0]
    N = B * C

    # Lane-dense slab: columns are (batch, channel) pairs, last dim = B*C.
    x2 = jnp.transpose(x, (1, 0, 2)).reshape(L, N)          # [L, B*C]
    aw_row = jnp.tile(aff_w, B).reshape(1, N)               # aff_w[col % C]
    ab_row = jnp.tile(aff_b, B).reshape(1, N)
    b_col = lin_b.reshape(P, 1)
    sw_col = jnp.sum(lin_w, axis=1, keepdims=True)          # rowsum(W), [P, 1]

    Nt = _pick_col_tile(N, L, P)
    grid = (N // Nt,)

    out2 = pl.pallas_call(
        _rlinear_kernel,
        out_shape=jax.ShapeDtypeStruct((P, N), x.dtype),
        grid_spec=pltpu.PrefetchScalarGridSpec(
            num_scalar_prefetch=0,
            grid=grid,
            in_specs=[
                pl.BlockSpec((L, Nt), lambda n: (0, n)),     # x slab tile
                pl.BlockSpec((P, L), lambda n: (0, 0)),      # W (resident)
                pl.BlockSpec((P, 1), lambda n: (0, 0)),      # bias
                pl.BlockSpec((P, 1), lambda n: (0, 0)),      # rowsum(W)
                pl.BlockSpec((1, Nt), lambda n: (0, n)),     # affine weight
                pl.BlockSpec((1, Nt), lambda n: (0, n)),     # affine bias
            ],
            out_specs=pl.BlockSpec((P, Nt), lambda n: (0, n)),
        ),
        compiler_params=pltpu.CompilerParams(
            dimension_semantics=("parallel",),
        ),
    )(x2, lin_w, b_col, sw_col, aw_row, ab_row)

    # [P, B*C] -> [B, P, C]
    return jnp.transpose(out2.reshape(P, B, C), (1, 0, 2))


def rlinear_reference(x, lin_w, lin_b, aff_w, aff_b):
    mean = jnp.mean(x, axis=1, keepdims=True)
    stdev = jnp.sqrt(jnp.var(x, axis=1, keepdims=True) + EPS)
    xn = (x - mean) / stdev
    xn = xn * aff_w + aff_b
    pred = jnp.einsum("blc,pl->bpc", xn, lin_w) + lin_b[None, :, None]
    pred = (pred - aff_b) / (aff_w + EPS * EPS)
    pred = pred * stdev + mean
    return pred


if __name__ == "__main__":
    # Small config: seq_len=32, pred_len=16, enc_in=8, batch=2, individual=False
    B, L, P, C = 2, 32, 16, 8

    key = jax.random.PRNGKey(0)
    k_x, k_w, k_b = jax.random.split(key, 3)

    x = jax.random.normal(k_x, (B, L, C), dtype=jnp.float32)

    # Deterministic parameter init (nn.Linear-like uniform bound, RevIN affine ones/zeros)
    bound = 1.0 / (L ** 0.5)
    lin_w = jax.random.uniform(k_w, (P, L), minval=-bound, maxval=bound, dtype=jnp.float32)
    lin_b = jax.random.uniform(k_b, (P,), minval=-bound, maxval=bound, dtype=jnp.float32)
    aff_w = jnp.ones((C,), dtype=jnp.float32)   # RevIN affine_weight
    aff_b = jnp.zeros((C,), dtype=jnp.float32)  # RevIN affine_bias

    out = rlinear_forward(x, lin_w, lin_b, aff_w, aff_b)
    out = jax.block_until_ready(out)

    ref = rlinear_reference(x, lin_w, lin_b, aff_w, aff_b)
    assert out.shape == (B, P, C)
    assert jnp.allclose(out, ref, atol=1e-4, rtol=1e-4), "mismatch vs reference"

    print("KERNEL_OK")
</pallas_src>

<mosaic_0001>
module attributes {stable_mosaic.version = 11 : i64} {
  func.func @_rlinear_kernel(%arg0: i32, %arg1: memref<32x16xf32, #tpu.memory_space<vmem>>, %arg2: memref<16x32xf32, #tpu.memory_space<vmem>>, %arg3: memref<16x1xf32, #tpu.memory_space<vmem>>, %arg4: memref<16x1xf32, #tpu.memory_space<vmem>>, %arg5: memref<1x16xf32, #tpu.memory_space<vmem>>, %arg6: memref<1x16xf32, #tpu.memory_space<vmem>>, %arg7: memref<16x16xf32, #tpu.memory_space<vmem>>) attributes {dimension_semantics = [#tpu.dimension_semantics<parallel>], iteration_bounds = array<i64: 1>, scalar_prefetch = 0 : i64, scratch_operands = 0 : i64, tpu.core_type = #tpu.core_type<tc>, window_params = [{transform_indices = @transform_0, window_bounds = array<i64: 32, 16>}, {pipeline_mode = #tpu.pipeline_mode<synchronous>, transform_indices = @transform_1, window_bounds = array<i64: 16, 32>}, {pipeline_mode = #tpu.pipeline_mode<synchronous>, transform_indices = @transform_2, window_bounds = array<i64: 16, 1>}, {pipeline_mode = #tpu.pipeline_mode<synchronous>, transform_indices = @transform_3, window_bounds = array<i64: 16, 1>}, {transform_indices = @transform_4, window_bounds = array<i64: 1, 16>}, {transform_indices = @transform_5, window_bounds = array<i64: 1, 16>}, {transform_indices = @transform_6, window_bounds = array<i64: 16, 16>}]} {
    %c0 = arith.constant 0 : index
    %c0_0 = arith.constant 0 : index
    %0 = vector.load %arg1[%c0, %c0_0] : memref<32x16xf32, #tpu.memory_space<vmem>>, vector<32x16xf32>
    %c0_1 = arith.constant 0 : index
    %c0_2 = arith.constant 0 : index
    %1 = vector.load %arg5[%c0_1, %c0_2] : memref<1x16xf32, #tpu.memory_space<vmem>>, vector<1x16xf32>
    %c0_3 = arith.constant 0 : index
    %c0_4 = arith.constant 0 : index
    %2 = vector.load %arg6[%c0_3, %c0_4] : memref<1x16xf32, #tpu.memory_space<vmem>>, vector<1x16xf32>
    %cst = arith.constant dense<0.000000e+00> : vector<16xf32>
    %3 = vector.multi_reduction <add>, %0, %cst [0] : vector<32x16xf32> to vector<16xf32>
    %4 = vector.shape_cast %3 : vector<16xf32> to vector<1x16xf32>
    %cst_5 = arith.constant 3.200000e+01 : f32
    %5 = vector.broadcast %cst_5 : f32 to vector<1x16xf32>
    %6 = arith.divf %4, %5 : vector<1x16xf32>
    %7 = arith.mulf %0, %0 : vector<32x16xf32>
    %cst_6 = arith.constant dense<0.000000e+00> : vector<16xf32>
    %8 = vector.multi_reduction <add>, %7, %cst_6 [0] : vector<32x16xf32> to vector<16xf32>
    %9 = vector.shape_cast %8 : vector<16xf32> to vector<1x16xf32>
    %cst_7 = arith.constant 3.200000e+01 : f32
    %10 = vector.broadcast %cst_7 : f32 to vector<1x16xf32>
    %11 = arith.divf %9, %10 : vector<1x16xf32>
    %12 = arith.mulf %6, %6 : vector<1x16xf32>
    %13 = arith.subf %11, %12 : vector<1x16xf32>
    %cst_8 = arith.constant 0.000000e+00 : f32
    %14 = vector.broadcast %cst_8 : f32 to vector<1x16xf32>
    %15 = arith.maximumf %13, %14 : vector<1x16xf32>
    %cst_9 = arith.constant 9.99999974E-6 : f32
    %16 = vector.broadcast %cst_9 : f32 to vector<1x16xf32>
    %17 = arith.addf %15, %16 : vector<1x16xf32>
    %18 = math.sqrt %17 : vector<1x16xf32>
    %cst_10 = arith.constant 9.99999974E-6 : f32
    %19 = vector.broadcast %cst_10 : f32 to vector<1x16xf32>
    %20 = arith.addf %15, %19 : vector<1x16xf32>
    %21 = math.rsqrt %20 : vector<1x16xf32>
    %22 = arith.mulf %1, %21 : vector<1x16xf32>
    %23 = arith.mulf %6, %22 : vector<1x16xf32>
    %24 = arith.subf %2, %23 : vector<1x16xf32>
    %cst_11 = arith.constant 1.000000e-10 : f32
    %25 = vector.broadcast %cst_11 : f32 to vector<1x16xf32>
    %26 = arith.addf %1, %25 : vector<1x16xf32>
    %27 = tpu.reciprocal %26 : vector<1x16xf32> -> vector<1x16xf32>
    %28 = arith.mulf %18, %27 : vector<1x16xf32>
    %c0_12 = arith.constant 0 : index
    %c0_13 = arith.constant 0 : index
    %29 = vector.load %arg2[%c0_12, %c0_13] : memref<16x32xf32, #tpu.memory_space<vmem>>, vector<16x32xf32>
    %cst_14 = arith.constant dense<0.000000e+00> : vector<16x16xf32>
    %30 = tpu.matmul %29, %0, %cst_14 {dimension_numbers = #tpu.dot_dimension_numbers<[1], [0], [0], [1], [0, 0, 1, 1], [], []>} : vector<16x32xf32>, vector<32x16xf32>, vector<16x16xf32> -> vector<16x16xf32>
    %31 = vector.broadcast %22 : vector<1x16xf32> to vector<16x16xf32>
    %32 = arith.mulf %30, %31 : vector<16x16xf32>
    %c0_15 = arith.constant 0 : index
    %c0_16 = arith.constant 0 : index
    %33 = vector.load %arg4[%c0_15, %c0_16] : memref<16x1xf32, #tpu.memory_space<vmem>>, vector<16x1xf32>
    %34 = vector.broadcast %33 : vector<16x1xf32> to vector<16x16xf32>
    %35 = vector.broadcast %24 : vector<1x16xf32> to vector<16x16xf32>
    %36 = arith.mulf %34, %35 : vector<16x16xf32>
    %37 = arith.addf %32, %36 : vector<16x16xf32>
    %c0_17 = arith.constant 0 : index
    %c0_18 = arith.constant 0 : index
    %38 = vector.load %arg3[%c0_17, %c0_18] : memref<16x1xf32, #tpu.memory_space<vmem>>, vector<16x1xf32>
    %39 = vector.broadcast %38 : vector<16x1xf32> to vector<16x16xf32>
    %40 = arith.addf %37, %39 : vector<16x16xf32>
    %41 = vector.broadcast %2 : vector<1x16xf32> to vector<16x16xf32>
    %42 = arith.subf %40, %41 : vector<16x16xf32>
    %43 = vector.broadcast %28 : vector<1x16xf32> to vector<16x16xf32>
    %44 = arith.mulf %42, %43 : vector<16x16xf32>
    %45 = vector.broadcast %6 : vector<1x16xf32> to vector<16x16xf32>
    %46 = arith.addf %44, %45 : vector<16x16xf32>
    %c0_19 = arith.constant 0 : index
    %c0_20 = arith.constant 0 : index
    %47 = vector.load %arg7[%c0_19, %c0_20] : memref<16x16xf32, #tpu.memory_space<vmem>>, vector<16x16xf32>
    tpu.vector_store %arg7[%c0_19, %c0_20], %46 {strides = array<i32>} : memref<16x16xf32, #tpu.memory_space<vmem>>, vector<16x16xf32>,
    return
  }
  func.func @transform_0(%arg0: i32) -> (i32, i32) {
    %c0_i32 = arith.constant 0 : i32
    %c0_i32_0 = arith.constant 0 : i32
    return %c0_i32, %arg0 : i32, i32
  }
  func.func @transform_1(%arg0: i32) -> (i32, i32) {
    %c0_i32 = arith.constant 0 : i32
    %c0_i32_0 = arith.constant 0 : i32
    %c0_i32_1 = arith.constant 0 : i32
    return %c0_i32, %c0_i32_0 : i32, i32
  }
  func.func @transform_2(%arg0: i32) -> (i32, i32) {
    %c0_i32 = arith.constant 0 : i32
    %c0_i32_0 = arith.constant 0 : i32
    %c0_i32_1 = arith.constant 0 : i32
    return %c0_i32, %c0_i32_0 : i32, i32
  }
  func.func @transform_3(%arg0: i32) -> (i32, i32) {
    %c0_i32 = arith.constant 0 : i32
    %c0_i32_0 = arith.constant 0 : i32
    %c0_i32_1 = arith.constant 0 : i32
    return %c0_i32, %c0_i32_0 : i32, i32
  }
  func.func @transform_4(%arg0: i32) -> (i32, i32) {
    %c0_i32 = arith.constant 0 : i32
    %c0_i32_0 = arith.constant 0 : i32
    return %c0_i32, %arg0 : i32, i32
  }
  func.func @transform_5(%arg0: i32) -> (i32, i32) {
    %c0_i32 = arith.constant 0 : i32
    %c0_i32_0 = arith.constant 0 : i32
    return %c0_i32, %arg0 : i32, i32
  }
  func.func @transform_6(%arg0: i32) -> (i32, i32) {
    %c0_i32 = arith.constant 0 : i32
    %c0_i32_0 = arith.constant 0 : i32
    return %c0_i32, %arg0 : i32, i32
  }
}

</mosaic_0001>

<llo_original>
// kernel: tpu_custom_call.1
$region0: #{tpu_custom_call.1}
  #allocation0 [shape = 'u32[]', space=smem, size = 0x4, offset = 0x4, fixed_abs, tag = 'smem constant byte address 0x4 - core index']
  #allocation1 [shape = 'u32[144,128]{1,0:T(1,128)}', space=vmem, size = 0x12000, scoped, tag = 'internal scratch']
  %s0 = inlined_call_operand.vmem [shape: f32[32,16], index: 0, kind: input, shape index: {}]
  %s1 = inlined_call_operand.vmem [shape: f32[16,32], index: 1, kind: input, shape index: {}]
  %s2 = inlined_call_operand.vmem [shape: f32[16,1], index: 2, kind: input, shape index: {}]
  %s3 = inlined_call_operand.vmem [shape: f32[16,1], index: 3, kind: input, shape index: {}]
  %s4 = inlined_call_operand.vmem [shape: f32[1,16], index: 4, kind: input, shape index: {}]
  %s5 = inlined_call_operand.vmem [shape: f32[1,16], index: 5, kind: input, shape index: {}]
  %s6 = inlined_call_operand.hbm [shape: f32[16,16], index: 6, kind: output, shape index: {}]
  %s7 = sld [smem:[#allocation0]]
  $region34: #{tpu_custom_call.1} parent=0
    _
  %s9 = ssub.s32 1, %s7
  %s10 = scalar_select 0, %s9, %s7
  $region1: #{tpu_custom_call.1} parent=0
    #allocation2 [shape = 'u8[8192]{0}', space=vmem, size = 0x2000, scoped, tag = 'output window, operand 0, single buffered']
    #allocation3 [shape = 's32[1]{0}', space=sflag, size = 0x4, scoped, tag = 'scoped memory for tpu_custom_call.1']
    %11 = vsyncpa [#allocation3], 0
    // Predicated region
    $region2: #{tpu_custom_call.1} parent=1 // pred_check
      _
    $region3: #{tpu_custom_call.1} parent=1 // pred_check_branch
      %13 = sbr.rel (0) target = $region5
    $region4: #{tpu_custom_call.1} parent=1 // pred_region
      _
    $region5: #{tpu_custom_call.1} parent=1 // pred_fallthru
      _
    // Predicated region
    $region6: #{tpu_custom_call.1} parent=1 // pred_check
      _
    $region7: #{tpu_custom_call.1} parent=1 // pred_check_branch
      %15 = sbr.rel (0) target = $region9
    $region8: #{tpu_custom_call.1} parent=1 // pred_region
      _
    $region9: #{tpu_custom_call.1} parent=1 // pred_fallthru
      _
    // Predicated region
    $region10: #{tpu_custom_call.1} parent=1 // pred_check
      _
    $region11: #{tpu_custom_call.1} parent=1 // pred_check_branch
      %17 = sbr.rel (0) target = $region13
    $region12: #{tpu_custom_call.1} parent=1 // pred_region
      _
    $region13: #{tpu_custom_call.1} parent=1 // pred_fallthru
      _
    // Predicated region
    $region14: #{tpu_custom_call.1} parent=1 // pred_check
      _
    $region15: #{tpu_custom_call.1} parent=1 // pred_check_branch
      %19 = sbr.rel (0) target = $region17
    $region16: #{tpu_custom_call.1} parent=1 // pred_region
      _
    $region17: #{tpu_custom_call.1} parent=1 // pred_fallthru
      _
    // Predicated region
    $region18: #{tpu_custom_call.1} parent=1 // pred_check
      _
    $region19: #{tpu_custom_call.1} parent=1 // pred_check_branch
      %21 = sbr.rel (0) target = $region21
    $region20: #{tpu_custom_call.1} parent=1 // pred_region
      _
    $region21: #{tpu_custom_call.1} parent=1 // pred_fallthru
      _
    // Predicated region
    $region22: #{tpu_custom_call.1} parent=1 // pred_check
      _
    $region23: #{tpu_custom_call.1} parent=1 // pred_check_branch
      %23 = sbr.rel (0) target = $region25
    $region24: #{tpu_custom_call.1} parent=1 // pred_region
      _
    $region25: #{tpu_custom_call.1} parent=1 // pred_fallthru
      _
    %v24 = vld [vmem:[%s0] sm:$0xff]
    %v25 = vld [vmem:[%s0 + $0x8] sm:$0xff]
    %v26 = vld [vmem:[%s0 + $0x10] sm:$0xff]
    %v27 = vld [vmem:[%s0 + $0x18] sm:$0xff]
    %v28 = vld [vmem:[%s4] sm:$0x1]
    %v29 = vld [vmem:[%s5] sm:$0x1]
    %vm30 = vcmask 130048
    %v31 = vsel %vm30, %v24, 0.0
    %v32 = vsel %vm30, %v25, 0.0
    %v33 = vadd.f32 %v31, %v32
    %v34 = vsel %vm30, %v26, 0.0
    %v35 = vadd.f32 %v33, %v34
    %v36 = vsel %vm30, %v27, 0.0
    %v37 = vadd.f32 %v35, %v36
    %v38 = vrot.slane %v37, 4
    %v39 = vadd.f32 %v37, %v38
    %v40 = vrot.slane %v39, 2
    %v41 = vadd.f32 %v39, %v40
    %v42 = vrot.slane %v41, 1
    %v43 = vadd.f32 %v41, %v42
    %v44 = vrcp.pop 32.0
    %v45 = vmul.f32 %v43, %v44
    %v46 = vmul.f32 %v24, %v24
    %v47 = vmul.f32 %v25, %v25
    %v48 = vmul.f32 %v26, %v26
    %v49 = vmul.f32 %v27, %v27
    %v50 = vsel %vm30, %v46, 0.0
    %v51 = vsel %vm30, %v47, 0.0
    %v52 = vadd.f32 %v50, %v51
    %v53 = vsel %vm30, %v48, 0.0
    %v54 = vadd.f32 %v52, %v53
    %v55 = vsel %vm30, %v49, 0.0
    %v56 = vadd.f32 %v54, %v55
    %v57 = vrot.slane %v56, 4
    %v58 = vadd.f32 %v56, %v57
    %v59 = vrot.slane %v58, 2
    %v60 = vadd.f32 %v58, %v59
    %v61 = vrot.slane %v60, 1
    %v62 = vadd.f32 %v60, %v61
    %v63 = vmul.f32 %v62, %v44
    %v64 = vmul.f32 %v45, %v45
    %v65 = vsub.f32 %v63, %v64
    %v66 = vmax.f32 %v65, 0.0
    %v67 = vadd.f32 %v66, 1e-05
    %v68 = vrsqrt.pop %v67
    %v69 = vmul.f32 %v67, %v68
    %vm70 = vcmp.eq.f32.partialorder %v67, inf
    %v71 = vsel %vm70, %v67, %v69
    %vm72 = vcmp.eq.f32.partialorder %v67, 0.0
    %v73 = vand.u32 %v67, 2147483648
    %v74 = vsel %vm72, %v73, %v71
    %v75 = vrsqrt.pop %v67
    %v76 = vmul.f32 %v28, %v75
    %v77 = vmul.f32 %v45, %v76
    %v78 = vsub.f32 %v29, %v77
    %v79 = vadd.f32 %v28, 1e-10
    %v80 = vrcp.pop %v79
    %v81 = vmul.f32 %v74, %v80
    %v82 = vld [vmem:[%s1] sm:$0xff]
    %v83 = vld [vmem:[%s1 + $0x8] sm:$0xff]
    %vm84 = vcmask 261120
    %v86 = vsel %vm84, %v82, 0
    %v89 = vsel %vm84, %v83, 0
    %91 = vmatprep.subr.mxu0 0.0
    %92 = vmatpush1.msra.mxu0 0.0
    %93 = vmatprep.subr.mxu0 0.0
    %94 = vmatpush1.msra.mxu0 0.0
    %95 = vmatprep.subr.mxu0 0.0
    %96 = vmatpush1.msra.mxu0 0.0
    %97 = vmatprep.subr.mxu0 0.0
    %98 = vmatpush1.msra.mxu0 0.0
    %99 = vmatprep.subr.mxu0 0.0
    %100 = vmatpush1.msra.mxu0 0.0
    %101 = vmatprep.subr.mxu0 0.0
    %102 = vmatpush1.msra.mxu0 0.0
    %103 = vmatprep.subr.mxu0 0.0
    %104 = vmatpush1.msra.mxu0 0.0
    %105 = vmatprep.subr.mxu0 0.0
    %106 = vmatpush1.msra.mxu0 0.0
    %107 = vmatprep.subr.mxu0 0.0
    %108 = vmatpush1.msra.mxu0 0.0
    %109 = vmatprep.subr.mxu0 0.0
    %110 = vmatpush1.msra.mxu0 0.0
    %111 = vmatprep.subr.mxu0 0.0
    %112 = vmatpush1.msra.mxu0 0.0
    %113 = vmatprep.subr.mxu0 0.0
    %114 = vmatpush1.msra.mxu0 0.0
    %115 = vmatprep.subr.mxu0 0.0
    %116 = vmatpush1.msra.mxu0 %v27
    %117 = vmatprep.subr.mxu0 0.0
    %118 = vmatpush1.msra.mxu0 %v26
    %119 = vmatprep.subr.mxu0 0.0
    %120 = vmatpush1.msra.mxu0 %v25
    %121 = vmatprep.subr.mxu0 0.0
    %122 = vmatpush1.msra.mxu0 %v24
    %123 = vmatprep.subr.mxu0 0.0
    %124 = vmatpush2.msra.mxu0 0.0
    %125 = vmatprep.subr.mxu0 0.0
    %126 = vmatpush2.msra.mxu0 0.0
    %127 = vmatprep.subr.mxu0 0.0
    %128 = vmatpush2.msra.mxu0 0.0
    %129 = vmatprep.subr.mxu0 0.0
    %130 = vmatpush2.msra.mxu0 0.0
    %131 = vmatprep.subr.mxu0 0.0
    %132 = vmatpush2.msra.mxu0 0.0
    %133 = vmatprep.subr.mxu0 0.0
    %134 = vmatpush2.msra.mxu0 0.0
    %135 = vmatprep.subr.mxu0 0.0
    %136 = vmatpush2.msra.mxu0 0.0
    %137 = vmatprep.subr.mxu0 0.0
    %138 = vmatpush2.msra.mxu0 0.0
    %139 = vmatprep.subr.mxu0 0.0
    %140 = vmatpush2.msra.mxu0 0.0
    %141 = vmatprep.subr.mxu0 0.0
    %142 = vmatpush2.msra.mxu0 0.0
    %143 = vmatprep.subr.mxu0 0.0
    %144 = vmatpush2.msra.mxu0 0.0
    %145 = vmatprep.subr.mxu0 0.0
    %146 = vmatpush2.msra.mxu0 0.0
    %147 = vmatprep.subr.mxu0 0.0
    %148 = vmatpush2.msra.mxu0 0.0
    %149 = vmatprep.subr.mxu0 0.0
    %150 = vmatpush2.msra.mxu0 0.0
    %151 = vmatprep.subr.mxu0 0.0
    %152 = vmatpush2.msra.mxu0 0.0
    %153 = vmatprep.subr.mxu0 0.0
    %154 = vmatpush2.msra.mxu0 0.0
    %155 = vmatprep.mubr.f32.mxu0 0.0
    %156 = vmatmul.mubr.f32.gmra.mxu0 %v86
    %v157 = vpop.f32.mrf.mxu0
    %v158 = vadd.f32 0.0, %v157
    %v159 = vpop.f32.mrf.mxu0
    %160 = vmatprep.mubr.f32.mxu0 0.0
    %161 = vmatmul.mubr.f32.gmra.mxu0 %v89
    %v162 = vpop.f32.mrf.mxu0
    %v163 = vadd.f32 0.0, %v162
    %v164 = vpop.f32.mrf.mxu0
    %165 = vdwg.mxu0
    %v167 = vlaneseq
    %v168 = vshrl.u32 %v167, 7
    %v169 = vsub.s32 0, %v168
    %v170 = vrot.slane %v76, %v169
    %v172 = vmul.f32 %v158, %v170
    %v173 = vmul.f32 %v163, %v170
    %v174 = vld [vmem:[%s3] sm:$0xff]
    %v175 = vld [vmem:[%s3 + $0x8] sm:$0xff]
    %177 = vset.pattern.permute.xlu0 0
    %178 = vperm.xlu0 %177, %v174
    %v179 = vpop.permute.xlu0 %178
    %182 = vset.pattern.permute.xlu0 0
    %183 = vperm.xlu0 %182, %v175
    %v184 = vpop.permute.xlu0 %183
    %v187 = vlaneseq
    %v188 = vshrl.u32 %v187, 7
    %v189 = vsub.s32 0, %v188
    %v190 = vrot.slane %v78, %v189
    %v192 = vmul.f32 %v179, %v190
    %v193 = vmul.f32 %v184, %v190
    %v194 = vadd.f32 %v172, %v192
    %v195 = vadd.f32 %v173, %v193
    %v196 = vld [vmem:[%s2] sm:$0xff]
    %v197 = vld [vmem:[%s2 + $0x8] sm:$0xff]
    %199 = vset.pattern.permute.xlu0 0
    %200 = vperm.xlu0 %199, %v196
    %v201 = vpop.permute.xlu0 %200
    %204 = vset.pattern.permute.xlu0 0
    %205 = vperm.xlu0 %204, %v197
    %v206 = vpop.permute.xlu0 %205
    %v208 = vadd.f32 %v194, %v201
    %v209 = vadd.f32 %v195, %v206
    %v211 = vlaneseq
    %v212 = vshrl.u32 %v211, 7
    %v213 = vsub.s32 0, %v212
    %v214 = vrot.slane %v29, %v213
    %v216 = vsub.f32 %v208, %v214
    %v217 = vsub.f32 %v209, %v214
    %v218 = vlaneseq
    %v219 = vshrl.u32 %v218, 7
    %v220 = vsub.s32 0, %v219
    %v221 = vrot.slane %v81, %v220
    %v222 = vmul.f32 %v216, %v221
    %v223 = vmul.f32 %v217, %v221
    %v224 = vadd.f32 %v222, %v45
    %v225 = vadd.f32 %v223, %v45
    %226 = vst.msk [vmem:[#allocation2] sm:$0xff] %vm30, %v224
    %227 = vst.msk [vmem:[#allocation2 + $0x8] sm:$0xff] %vm30, %v225
    // Predicated region
    $region26: #{tpu_custom_call.1} parent=1 // pred_check
      _
    $region27: #{tpu_custom_call.1} parent=1 // pred_check_branch
      %229 = sbr.rel (0) target = $region29
    $region28: #{tpu_custom_call.1} parent=1 // pred_region
      %s231 = ssub.s32 256, 256
      %232 = vsyncadd [#allocation3], %s231
      %s233 = sshll.u32 [#allocation2], 4
      %s234 = int_to_ptr.vmem [resolvable:$true] %s233
      %239 = dma.vmem_to_hbm [thread:$0]  %s234, 256, %s6, [#allocation3], 128, 128, 8
    $region29: #{tpu_custom_call.1} parent=1 // pred_fallthru
      _
    // Predicated region
    $region30: #{tpu_custom_call.1} parent=1 // pred_check
      _
    $region31: #{tpu_custom_call.1} parent=1 // pred_check_branch
      %241 = sbr.rel (0) target = $region33
    $region32: #{tpu_custom_call.1} parent=1 // pred_region
      %242 = dma.done [#allocation3], 256
    $region33: #{tpu_custom_call.1} parent=1 // pred_fallthru
      _
    %243 = vsyncpa [#allocation3], 1

</llo_original>
